<compile_context>
chip_gen: v5e
topology: v5e:2x2
jax: 0.10.0
libtpu: 0.0.40
codegen_flags: <defaults>
</compile_context>

<pallas_src>
import jax
import jax.numpy as jnp
from jax.experimental import pallas as pl
from jax.experimental.pallas import tpu as pltpu


def _coalesce_runs(perm):
    """Group a permutation into maximal runs of consecutive source channels.

    Returns a tuple of (dst_start, src_start, length) with dst_start covering
    0..len(perm)-1 exactly once.
    """
    runs = []
    i, P = 0, len(perm)
    while i < P:
        j = i + 1
        while j < P and perm[j] == perm[j - 1] + 1:
            j += 1
        runs.append((i, perm[i], j - i))
        i = j
    return tuple(runs)


def _make_permute_dma_kernel(runs, ring):
    """Kernel body: unrolled HBM->HBM copies with a ring of outstanding DMAs."""

    def kernel(x_hbm, o_hbm, sems):
        copies = []
        for idx, (dst, src, length) in enumerate(runs):
            slot = idx % ring
            cp = pltpu.make_async_copy(
                x_hbm.at[:, src:src + length, :],
                o_hbm.at[:, dst:dst + length, :],
                sems.at[slot],
            )
            if idx >= ring:
                # Free this semaphore slot before reusing it.
                copies[idx - ring].wait()
            cp.start()
            copies.append(cp)
        # Drain the copies still in flight.
        for cp in copies[max(0, len(copies) - ring):]:
            cp.wait()

    return kernel


def channel_permute(x: jax.Array, permutation, *, max_outstanding: int = 8) -> jax.Array:
    """Pallas equivalent of `input[:, permutation]` for an NCHW tensor."""
    N, C, H, W = x.shape
    perm = [int(p) for p in permutation]
    P = len(perm)
    for p in perm:
        if not 0 <= p < C:
            raise ValueError(f"permutation entry {p} out of range for C={C}")

    HW = H * W
    itemsize = jnp.dtype(x.dtype).itemsize

    runs = _coalesce_runs(perm)
    ring = max(1, min(max_outstanding, len(runs)))

    # Free view: NCHW is contiguous, so (N, C, H*W) is just a reshape.
    x3 = x.reshape(N, C, HW)

    out3 = pl.pallas_call(
        _make_permute_dma_kernel(runs, ring),
        out_shape=jax.ShapeDtypeStruct((N, P, HW), x.dtype),
        in_specs=[pl.BlockSpec(memory_space=pl.ANY)],   # raw HBM ref, no auto-DMA
        out_specs=pl.BlockSpec(memory_space=pl.ANY),    # written only via DMA
        scratch_shapes=[pltpu.SemaphoreType.DMA((ring,))],
        compiler_params=pltpu.CompilerParams(has_side_effects=True),
        cost_estimate=pl.CostEstimate(
            flops=0,
            transcendentals=0,
            bytes_accessed=int(2 * N * P * HW * itemsize),
        ),
    )(x3)

    return out3.reshape(N, P, H, W)


if __name__ == "__main__":
    key = jax.random.PRNGKey(0)

    # Module default: permutation=[2, 1, 0] -> 3 channels (RGB -> BGR swap).
    x = jax.random.normal(key, (2, 3, 16, 16), dtype=jnp.float32)
    permutation = [2, 1, 0]

    out = channel_permute(x, permutation)
    out = jax.block_until_ready(out)
    ref = jnp.take(x, jnp.asarray(permutation), axis=1)
    assert out.shape == ref.shape, (out.shape, ref.shape)
    assert jnp.array_equal(out, ref), "mismatch vs reference channel permute"

    # Extra check: wider channel count with contiguous runs (exercises the
    # run-coalescing and the DMA ring).
    x2 = jax.random.normal(jax.random.PRNGKey(1), (2, 8, 16, 16), dtype=jnp.float32)
    perm2 = [4, 5, 6, 7, 0, 1, 2, 3]
    out2 = jax.block_until_ready(channel_permute(x2, perm2))
    ref2 = jnp.take(x2, jnp.asarray(perm2), axis=1)
    assert jnp.array_equal(out2, ref2), "mismatch vs reference channel permute (8ch)"

    print("KERNEL_OK")
</pallas_src>

<mosaic_0001>
module attributes {stable_mosaic.version = 11 : i64} {
  func.func @kernel(%arg0: memref<2x3x256xf32, #tpu.memory_space<any>>, %arg1: memref<2x3x256xf32, #tpu.memory_space<any>>, %arg2: memref<3x!tpu.dma_semaphore, #tpu.memory_space<semaphore_mem>>) attributes {dimension_semantics = [], scalar_prefetch = 0 : i64, scratch_operands = 1 : i64, tpu.core_type = #tpu.core_type<tc>} {
    %c0_i32 = arith.constant 0 : i32
    %c0_i32_0 = arith.constant 0 : i32
    %c2_i32 = arith.constant 2 : i32
    %c0_i32_1 = arith.constant 0 : i32
    %0 = tpu.memref_slice %arg0[%c0_i32_0, %c2_i32, %c0_i32_1] : memref<2x3x256xf32, #tpu.memory_space<any>> -> memref<2x1x256xf32, #tpu.memory_space<any>>
    %c0_i32_2 = arith.constant 0 : i32
    %c0_i32_3 = arith.constant 0 : i32
    %c0_i32_4 = arith.constant 0 : i32
    %1 = tpu.memref_slice %arg1[%c0_i32_2, %c0_i32_3, %c0_i32_4] : memref<2x3x256xf32, #tpu.memory_space<any>> -> memref<2x1x256xf32, #tpu.memory_space<any>>
    %2 = tpu.memref_slice %arg2[%c0_i32] : memref<3x!tpu.dma_semaphore, #tpu.memory_space<semaphore_mem>> -> memref<1x!tpu.dma_semaphore, #tpu.memory_space<semaphore_mem>>
    %3 = tpu.memref_squeeze %2 : memref<1x!tpu.dma_semaphore, #tpu.memory_space<semaphore_mem>> -> memref<!tpu.dma_semaphore, #tpu.memory_space<semaphore_mem>>
    tpu.enqueue_dma source(%0 : memref<2x1x256xf32, #tpu.memory_space<any>>) target(%1 : memref<2x1x256xf32, #tpu.memory_space<any>>) target_semaphore(%3 : memref<!tpu.dma_semaphore, #tpu.memory_space<semaphore_mem>>)
    %c1_i32 = arith.constant 1 : i32
    %c0_i32_5 = arith.constant 0 : i32
    %c1_i32_6 = arith.constant 1 : i32
    %c0_i32_7 = arith.constant 0 : i32
    %4 = tpu.memref_slice %arg0[%c0_i32_5, %c1_i32_6, %c0_i32_7] : memref<2x3x256xf32, #tpu.memory_space<any>> -> memref<2x1x256xf32, #tpu.memory_space<any>>
    %c0_i32_8 = arith.constant 0 : i32
    %c1_i32_9 = arith.constant 1 : i32
    %c0_i32_10 = arith.constant 0 : i32
    %5 = tpu.memref_slice %arg1[%c0_i32_8, %c1_i32_9, %c0_i32_10] : memref<2x3x256xf32, #tpu.memory_space<any>> -> memref<2x1x256xf32, #tpu.memory_space<any>>
    %6 = tpu.memref_slice %arg2[%c1_i32] : memref<3x!tpu.dma_semaphore, #tpu.memory_space<semaphore_mem>> -> memref<1x!tpu.dma_semaphore, #tpu.memory_space<semaphore_mem>>
    %7 = tpu.memref_squeeze %6 : memref<1x!tpu.dma_semaphore, #tpu.memory_space<semaphore_mem>> -> memref<!tpu.dma_semaphore, #tpu.memory_space<semaphore_mem>>
    tpu.enqueue_dma source(%4 : memref<2x1x256xf32, #tpu.memory_space<any>>) target(%5 : memref<2x1x256xf32, #tpu.memory_space<any>>) target_semaphore(%7 : memref<!tpu.dma_semaphore, #tpu.memory_space<semaphore_mem>>)
    %c2_i32_11 = arith.constant 2 : i32
    %c0_i32_12 = arith.constant 0 : i32
    %c0_i32_13 = arith.constant 0 : i32
    %c0_i32_14 = arith.constant 0 : i32
    %8 = tpu.memref_slice %arg0[%c0_i32_12, %c0_i32_13, %c0_i32_14] : memref<2x3x256xf32, #tpu.memory_space<any>> -> memref<2x1x256xf32, #tpu.memory_space<any>>
    %c0_i32_15 = arith.constant 0 : i32
    %c2_i32_16 = arith.constant 2 : i32
    %c0_i32_17 = arith.constant 0 : i32
    %9 = tpu.memref_slice %arg1[%c0_i32_15, %c2_i32_16, %c0_i32_17] : memref<2x3x256xf32, #tpu.memory_space<any>> -> memref<2x1x256xf32, #tpu.memory_space<any>>
    %10 = tpu.memref_slice %arg2[%c2_i32_11] : memref<3x!tpu.dma_semaphore, #tpu.memory_space<semaphore_mem>> -> memref<1x!tpu.dma_semaphore, #tpu.memory_space<semaphore_mem>>
    %11 = tpu.memref_squeeze %10 : memref<1x!tpu.dma_semaphore, #tpu.memory_space<semaphore_mem>> -> memref<!tpu.dma_semaphore, #tpu.memory_space<semaphore_mem>>
    tpu.enqueue_dma source(%8 : memref<2x1x256xf32, #tpu.memory_space<any>>) target(%9 : memref<2x1x256xf32, #tpu.memory_space<any>>) target_semaphore(%11 : memref<!tpu.dma_semaphore, #tpu.memory_space<semaphore_mem>>)
    %c0_i32_18 = arith.constant 0 : i32
    %c0_i32_19 = arith.constant 0 : i32
    %c2_i32_20 = arith.constant 2 : i32
    %c0_i32_21 = arith.constant 0 : i32
    %12 = tpu.memref_slice %arg0[%c0_i32_19, %c2_i32_20, %c0_i32_21] : memref<2x3x256xf32, #tpu.memory_space<any>> -> memref<2x1x256xf32, #tpu.memory_space<any>>
    %c0_i32_22 = arith.constant 0 : i32
    %c0_i32_23 = arith.constant 0 : i32
    %c0_i32_24 = arith.constant 0 : i32
    %13 = tpu.memref_slice %arg1[%c0_i32_22, %c0_i32_23, %c0_i32_24] : memref<2x3x256xf32, #tpu.memory_space<any>> -> memref<2x1x256xf32, #tpu.memory_space<any>>
    %14 = tpu.memref_slice %arg2[%c0_i32_18] : memref<3x!tpu.dma_semaphore, #tpu.memory_space<semaphore_mem>> -> memref<1x!tpu.dma_semaphore, #tpu.memory_space<semaphore_mem>>
    %15 = tpu.memref_squeeze %14 : memref<1x!tpu.dma_semaphore, #tpu.memory_space<semaphore_mem>> -> memref<!tpu.dma_semaphore, #tpu.memory_space<semaphore_mem>>
    tpu.wait_dma2 semaphore(%15 : memref<!tpu.dma_semaphore, #tpu.memory_space<semaphore_mem>>) src(%12 : memref<2x1x256xf32, #tpu.memory_space<any>>) dst(%13 : memref<2x1x256xf32, #tpu.memory_space<any>>)
    %c1_i32_25 = arith.constant 1 : i32
    %c0_i32_26 = arith.constant 0 : i32
    %c1_i32_27 = arith.constant 1 : i32
    %c0_i32_28 = arith.constant 0 : i32
    %16 = tpu.memref_slice %arg0[%c0_i32_26, %c1_i32_27, %c0_i32_28] : memref<2x3x256xf32, #tpu.memory_space<any>> -> memref<2x1x256xf32, #tpu.memory_space<any>>
    %c0_i32_29 = arith.constant 0 : i32
    %c1_i32_30 = arith.constant 1 : i32
    %c0_i32_31 = arith.constant 0 : i32
    %17 = tpu.memref_slice %arg1[%c0_i32_29, %c1_i32_30, %c0_i32_31] : memref<2x3x256xf32, #tpu.memory_space<any>> -> memref<2x1x256xf32, #tpu.memory_space<any>>
    %18 = tpu.memref_slice %arg2[%c1_i32_25] : memref<3x!tpu.dma_semaphore, #tpu.memory_space<semaphore_mem>> -> memref<1x!tpu.dma_semaphore, #tpu.memory_space<semaphore_mem>>
    %19 = tpu.memref_squeeze %18 : memref<1x!tpu.dma_semaphore, #tpu.memory_space<semaphore_mem>> -> memref<!tpu.dma_semaphore, #tpu.memory_space<semaphore_mem>>
    tpu.wait_dma2 semaphore(%19 : memref<!tpu.dma_semaphore, #tpu.memory_space<semaphore_mem>>) src(%16 : memref<2x1x256xf32, #tpu.memory_space<any>>) dst(%17 : memref<2x1x256xf32, #tpu.memory_space<any>>)
    %c2_i32_32 = arith.constant 2 : i32
    %c0_i32_33 = arith.constant 0 : i32
    %c0_i32_34 = arith.constant 0 : i32
    %c0_i32_35 = arith.constant 0 : i32
    %20 = tpu.memref_slice %arg0[%c0_i32_33, %c0_i32_34, %c0_i32_35] : memref<2x3x256xf32, #tpu.memory_space<any>> -> memref<2x1x256xf32, #tpu.memory_space<any>>
    %c0_i32_36 = arith.constant 0 : i32
    %c2_i32_37 = arith.constant 2 : i32
    %c0_i32_38 = arith.constant 0 : i32
    %21 = tpu.memref_slice %arg1[%c0_i32_36, %c2_i32_37, %c0_i32_38] : memref<2x3x256xf32, #tpu.memory_space<any>> -> memref<2x1x256xf32, #tpu.memory_space<any>>
    %22 = tpu.memref_slice %arg2[%c2_i32_32] : memref<3x!tpu.dma_semaphore, #tpu.memory_space<semaphore_mem>> -> memref<1x!tpu.dma_semaphore, #tpu.memory_space<semaphore_mem>>
    %23 = tpu.memref_squeeze %22 : memref<1x!tpu.dma_semaphore, #tpu.memory_space<semaphore_mem>> -> memref<!tpu.dma_semaphore, #tpu.memory_space<semaphore_mem>>
    tpu.wait_dma2 semaphore(%23 : memref<!tpu.dma_semaphore, #tpu.memory_space<semaphore_mem>>) src(%20 : memref<2x1x256xf32, #tpu.memory_space<any>>) dst(%21 : memref<2x1x256xf32, #tpu.memory_space<any>>)
    return
  }
}

</mosaic_0001>

<llo_original>
// kernel: tpu_custom_call.1
$region0: #{tpu_custom_call.1}
  #allocation0 [shape = 'u32[]', space=smem, size = 0x4, offset = 0x4, fixed_abs, tag = 'smem constant byte address 0x4 - core index']
  #allocation1 [shape = 'u32[72,128]{1,0:T(1,128)}', space=vmem, size = 0x9000, scoped, tag = 'internal scratch']
  #allocation2 [shape = 's32[3]{0}', space=sflag, size = 0xc, scoped, tag = 'scratch operand']
  #allocation3 [shape = 's32[]', space=sflag, size = 0x4, offset = 0, fixed_abs, tag = 'sflag constant byte address 0x0 - dummy sync flag']
  #allocation4 [shape = 's32[]', space=sflag, size = 0x4, offset = 0, fixed_abs, tag = 'sflag constant byte address 0x0 - dummy sync flag']
  #allocation5 [shape = 's32[]', space=sflag, size = 0x4, offset = 0, fixed_abs, tag = 'sflag constant byte address 0x0 - dummy sync flag']
  %s0 = inlined_call_operand.vmem [shape: f32[2,3,256], index: 0, kind: input, shape index: {}]
  %s1 = inlined_call_operand.vmem [shape: f32[2,3,256], index: 1, kind: output, shape index: {}]
  %s2 = sld [smem:[#allocation0]]
  $region92: #{tpu_custom_call.1} parent=0
    _
  %s4 = ssub.s32 1, %s2
  %s5 = scalar_select 0, %s4, %s2
  %s6 = scalar_lea.vmem %s0, 2
  // Predicated region
  $region2: #{tpu_custom_call.1} parent=0 // pred_check
    _
  $region3: #{tpu_custom_call.1} parent=0 // pred_check_branch
    %8 = sbr.rel target = $region5
  $region4: #{tpu_custom_call.1} parent=0 // pred_region
    // Predicated region
    $region17: #{tpu_custom_call.1} parent=4 // pred_check
      _
    $region18: #{tpu_custom_call.1} parent=4 // pred_check_branch
      %30 = sbr.rel (0) target = $region20
    $region19: #{tpu_custom_call.1} parent=4 // pred_region
      %s32 = ssub.s32 2, 1
      loop: start=0, step=1, limit=1
      $region21: #{tpu_custom_call.1} parent=19 // loop_pre_header
        _
      $region22: #{tpu_custom_call.1} parent=19 // loop_header
        %s34 = sphi 0, %s38
        %p35 = scmp.ge.s32.totalorder %s34, 1
        %s39 = sphi %s6, %s6
        %s40 = sphi %s1, %s1
      $region23: #{tpu_custom_call.1} parent=19 // loop_header_branch
        %37 = sbr.rel (%p35) target = $region27
      $region24: #{tpu_custom_call.1} parent=19 // loop_body
        %v41 = vld [vmem:[%s39] sm:%s32]
        %42 = vst [vmem:[%s40] sm:%s32] %v41
        %v43 = vld [vmem:[%s39 + $0x4] sm:%s32]
        %44 = vst [vmem:[%s40 + $0x4] sm:%s32] %v43
        %v45 = vld [vmem:[%s39 + $0x8] sm:%s32]
        %46 = vst [vmem:[%s40 + $0x8] sm:%s32] %v45
        %v47 = vld [vmem:[%s39 + $0xc] sm:%s32]
        %48 = vst [vmem:[%s40 + $0xc] sm:%s32] %v47
      $region25: #{tpu_custom_call.1} parent=19 // loop_footer
        %s38 = sadd.s32 1, %s34
      $region26: #{tpu_custom_call.1} parent=19 // loop_footer_branch
        %33 = sbr.rel target = $region22
      $region27: #{tpu_custom_call.1} parent=19 // loop_exit
        _
    $region20: #{tpu_custom_call.1} parent=4 // pred_fallthru
      _
  $region5: #{tpu_custom_call.1} parent=0 // pred_fallthru
    _
  // Predicated region
  $region6: #{tpu_custom_call.1} parent=0 // pred_check
    _
  $region7: #{tpu_custom_call.1} parent=0 // pred_check_branch
    %10 = sbr.rel (0) target = $region9
  $region8: #{tpu_custom_call.1} parent=0 // pred_region
    %s12 = ssub.s32 2, 1
    loop: start=0, step=1, limit=1
    $region10: #{tpu_custom_call.1} parent=8 // loop_pre_header
      _
    $region11: #{tpu_custom_call.1} parent=8 // loop_header
      %s14 = sphi 0, %s18
      %p15 = scmp.ge.s32.totalorder %s14, 1
      %s19 = sphi %s6, %s6
      %s20 = sphi %s1, %s1
    $region12: #{tpu_custom_call.1} parent=8 // loop_header_branch
      %17 = sbr.rel (%p15) target = $region16
    $region13: #{tpu_custom_call.1} parent=8 // loop_body
      %v21 = vld [vmem:[%s19] sm:%s12]
      %22 = vst [vmem:[%s20] sm:%s12] %v21
      %v23 = vld [vmem:[%s19 + $0x4] sm:%s12]
      %24 = vst [vmem:[%s20 + $0x4] sm:%s12] %v23
      %v25 = vld [vmem:[%s19 + $0x8] sm:%s12]
      %26 = vst [vmem:[%s20 + $0x8] sm:%s12] %v25
      %v27 = vld [vmem:[%s19 + $0xc] sm:%s12]
      %28 = vst [vmem:[%s20 + $0xc] sm:%s12] %v27
    $region14: #{tpu_custom_call.1} parent=8 // loop_footer
      %s18 = sadd.s32 1, %s14
    $region15: #{tpu_custom_call.1} parent=8 // loop_footer_branch
      %13 = sbr.rel target = $region11
    $region16: #{tpu_custom_call.1} parent=8 // loop_exit
      _
  $region9: #{tpu_custom_call.1} parent=0 // pred_fallthru
    _
  // Predicated region
  $region28: #{tpu_custom_call.1} parent=0 // pred_check
    _
  $region29: #{tpu_custom_call.1} parent=0 // pred_check_branch
    %51 = sbr.rel (0) target = $region31
  $region30: #{tpu_custom_call.1} parent=0 // pred_region
    %52 = vsyncadd [#allocation2], 64
  $region31: #{tpu_custom_call.1} parent=0 // pred_fallthru
    _
  %s53 = scalar_lea.vmem %s0, 1
  %s54 = scalar_lea.vmem %s1, 1
  %s55 = scalar_lea.sflag [#allocation2], 1
  // Predicated region
  $region32: #{tpu_custom_call.1} parent=0 // pred_check
    _
  $region33: #{tpu_custom_call.1} parent=0 // pred_check_branch
    %57 = sbr.rel target = $region35
  $region34: #{tpu_custom_call.1} parent=0 // pred_region
    // Predicated region
    $region47: #{tpu_custom_call.1} parent=34 // pred_check
      _
    $region48: #{tpu_custom_call.1} parent=34 // pred_check_branch
      %79 = sbr.rel (0) target = $region50
    $region49: #{tpu_custom_call.1} parent=34 // pred_region
      %s81 = ssub.s32 2, 1
      loop: start=0, step=1, limit=1
      $region51: #{tpu_custom_call.1} parent=49 // loop_pre_header
        _
      $region52: #{tpu_custom_call.1} parent=49 // loop_header
        %s83 = sphi 0, %s87
        %p84 = scmp.ge.s32.totalorder %s83, 1
        %s88 = sphi %s53, %s53
        %s89 = sphi %s54, %s54
      $region53: #{tpu_custom_call.1} parent=49 // loop_header_branch
        %86 = sbr.rel (%p84) target = $region57
      $region54: #{tpu_custom_call.1} parent=49 // loop_body
        %v90 = vld [vmem:[%s88] sm:%s81]
        %91 = vst [vmem:[%s89] sm:%s81] %v90
        %v92 = vld [vmem:[%s88 + $0x4] sm:%s81]
        %93 = vst [vmem:[%s89 + $0x4] sm:%s81] %v92
        %v94 = vld [vmem:[%s88 + $0x8] sm:%s81]
        %95 = vst [vmem:[%s89 + $0x8] sm:%s81] %v94
        %v96 = vld [vmem:[%s88 + $0xc] sm:%s81]
        %97 = vst [vmem:[%s89 + $0xc] sm:%s81] %v96
      $region55: #{tpu_custom_call.1} parent=49 // loop_footer
        %s87 = sadd.s32 1, %s83
      $region56: #{tpu_custom_call.1} parent=49 // loop_footer_branch
        %82 = sbr.rel target = $region52
      $region57: #{tpu_custom_call.1} parent=49 // loop_exit
        _
    $region50: #{tpu_custom_call.1} parent=34 // pred_fallthru
      _
  $region35: #{tpu_custom_call.1} parent=0 // pred_fallthru
    _
  // Predicated region
  $region36: #{tpu_custom_call.1} parent=0 // pred_check
    _
  $region37: #{tpu_custom_call.1} parent=0 // pred_check_branch
    %59 = sbr.rel (0) target = $region39
  $region38: #{tpu_custom_call.1} parent=0 // pred_region
    %s61 = ssub.s32 2, 1
    loop: start=0, step=1, limit=1
    $region40: #{tpu_custom_call.1} parent=38 // loop_pre_header
      _
    $region41: #{tpu_custom_call.1} parent=38 // loop_header
      %s63 = sphi 0, %s67
      %p64 = scmp.ge.s32.totalorder %s63, 1
      %s68 = sphi %s53, %s53
      %s69 = sphi %s54, %s54
    $region42: #{tpu_custom_call.1} parent=38 // loop_header_branch
      %66 = sbr.rel (%p64) target = $region46
    $region43: #{tpu_custom_call.1} parent=38 // loop_body
      %v70 = vld [vmem:[%s68] sm:%s61]
      %71 = vst [vmem:[%s69] sm:%s61] %v70
      %v72 = vld [vmem:[%s68 + $0x4] sm:%s61]
      %73 = vst [vmem:[%s69 + $0x4] sm:%s61] %v72
      %v74 = vld [vmem:[%s68 + $0x8] sm:%s61]
      %75 = vst [vmem:[%s69 + $0x8] sm:%s61] %v74
      %v76 = vld [vmem:[%s68 + $0xc] sm:%s61]
      %77 = vst [vmem:[%s69 + $0xc] sm:%s61] %v76
    $region44: #{tpu_custom_call.1} parent=38 // loop_footer
      %s67 = sadd.s32 1, %s63
    $region45: #{tpu_custom_call.1} parent=38 // loop_footer_branch
      %62 = sbr.rel target = $region41
    $region46: #{tpu_custom_call.1} parent=38 // loop_exit
      _
  $region39: #{tpu_custom_call.1} parent=0 // pred_fallthru
    _
  // Predicated region
  $region58: #{tpu_custom_call.1} parent=0 // pred_check
    _
  $region59: #{tpu_custom_call.1} parent=0 // pred_check_branch
    %100 = sbr.rel (0) target = $region61
  $region60: #{tpu_custom_call.1} parent=0 // pred_region
    %101 = vsyncadd %s55, 64
  $region61: #{tpu_custom_call.1} parent=0 // pred_fallthru
    _
  %s102 = scalar_lea.vmem %s1, 2
  %s103 = scalar_lea.sflag [#allocation2], 2
  // Predicated region
  $region62: #{tpu_custom_call.1} parent=0 // pred_check
    _
  $region63: #{tpu_custom_call.1} parent=0 // pred_check_branch
    %105 = sbr.rel target = $region65
  $region64: #{tpu_custom_call.1} parent=0 // pred_region
    // Predicated region
    $region77: #{tpu_custom_call.1} parent=64 // pred_check
      _
    $region78: #{tpu_custom_call.1} parent=64 // pred_check_branch
      %127 = sbr.rel (0) target = $region80
    $region79: #{tpu_custom_call.1} parent=64 // pred_region
      %s129 = ssub.s32 2, 1
      loop: start=0, step=1, limit=1
      $region81: #{tpu_custom_call.1} parent=79 // loop_pre_header
        _
      $region82: #{tpu_custom_call.1} parent=79 // loop_header
        %s131 = sphi 0, %s135
        %p132 = scmp.ge.s32.totalorder %s131, 1
        %s136 = sphi %s0, %s0
        %s137 = sphi %s102, %s102
      $region83: #{tpu_custom_call.1} parent=79 // loop_header_branch
        %134 = sbr.rel (%p132) target = $region87
      $region84: #{tpu_custom_call.1} parent=79 // loop_body
        %v138 = vld [vmem:[%s136] sm:%s129]
        %139 = vst [vmem:[%s137] sm:%s129] %v138
        %v140 = vld [vmem:[%s136 + $0x4] sm:%s129]
        %141 = vst [vmem:[%s137 + $0x4] sm:%s129] %v140
        %v142 = vld [vmem:[%s136 + $0x8] sm:%s129]
        %143 = vst [vmem:[%s137 + $0x8] sm:%s129] %v142
        %v144 = vld [vmem:[%s136 + $0xc] sm:%s129]
        %145 = vst [vmem:[%s137 + $0xc] sm:%s129] %v144
      $region85: #{tpu_custom_call.1} parent=79 // loop_footer
        %s135 = sadd.s32 1, %s131
      $region86: #{tpu_custom_call.1} parent=79 // loop_footer_branch
        %130 = sbr.rel target = $region82
      $region87: #{tpu_custom_call.1} parent=79 // loop_exit
        _
    $region80: #{tpu_custom_call.1} parent=64 // pred_fallthru
      _
  $region65: #{tpu_custom_call.1} parent=0 // pred_fallthru
    _
  // Predicated region
  $region66: #{tpu_custom_call.1} parent=0 // pred_check
    _
  $region67: #{tpu_custom_call.1} parent=0 // pred_check_branch
    %107 = sbr.rel (0) target = $region69
  $region68: #{tpu_custom_call.1} parent=0 // pred_region
    %s109 = ssub.s32 2, 1
    loop: start=0, step=1, limit=1
    $region70: #{tpu_custom_call.1} parent=68 // loop_pre_header
      _
    $region71: #{tpu_custom_call.1} parent=68 // loop_header
      %s111 = sphi 0, %s115
      %p112 = scmp.ge.s32.totalorder %s111, 1
      %s116 = sphi %s0, %s0
      %s117 = sphi %s102, %s102
    $region72: #{tpu_custom_call.1} parent=68 // loop_header_branch
      %114 = sbr.rel (%p112) target = $region76
    $region73: #{tpu_custom_call.1} parent=68 // loop_body
      %v118 = vld [vmem:[%s116] sm:%s109]
      %119 = vst [vmem:[%s117] sm:%s109] %v118
      %v120 = vld [vmem:[%s116 + $0x4] sm:%s109]
      %121 = vst [vmem:[%s117 + $0x4] sm:%s109] %v120
      %v122 = vld [vmem:[%s116 + $0x8] sm:%s109]
      %123 = vst [vmem:[%s117 + $0x8] sm:%s109] %v122
      %v124 = vld [vmem:[%s116 + $0xc] sm:%s109]
      %125 = vst [vmem:[%s117 + $0xc] sm:%s109] %v124
    $region74: #{tpu_custom_call.1} parent=68 // loop_footer
      %s115 = sadd.s32 1, %s111
    $region75: #{tpu_custom_call.1} parent=68 // loop_footer_branch
      %110 = sbr.rel target = $region71
    $region76: #{tpu_custom_call.1} parent=68 // loop_exit
      _
  $region69: #{tpu_custom_call.1} parent=0 // pred_fallthru
    _
  // Predicated region
  $region88: #{tpu_custom_call.1} parent=0 // pred_check
    _
  $region89: #{tpu_custom_call.1} parent=0 // pred_check_branch
    %148 = sbr.rel (0) target = $region91
  $region90: #{tpu_custom_call.1} parent=0 // pred_region
    %149 = vsyncadd %s103, 64
  $region91: #{tpu_custom_call.1} parent=0 // pred_fallthru
    _
  %s150 = smul.u32 2, 1
  %s151 = smul.u32 %s150, 2
  %s152 = sshll.u32 %s151, 4
  %153 = dma.done [#allocation2], %s152
  %s154 = sshll.u32 %s151, 4
  %155 = dma.done %s55, %s154
  %s156 = sshll.u32 %s151, 4
  %157 = dma.done %s103, %s156
  %158 = vsyncmov [#allocation2]
  %s159 = vpop.sfrf %158
  %p160 = scmp.eq.s32.totalorder %s159, 0
  %p161 = pneg %p160
  %163 = shalt.err (%p161)
  %s164 = scalar_lea.sflag [#allocation2], 1
  %165 = vsyncmov %s164
  %s166 = vpop.sfrf %165
  %p167 = scmp.eq.s32.totalorder %s166, 0
  %p168 = pneg %p167
  %170 = shalt.err (%p168)
  %s171 = scalar_lea.sflag [#allocation2], 2
  %172 = vsyncmov %s171
  %s173 = vpop.sfrf %172
  %p174 = scmp.eq.s32.totalorder %s173, 0
  %p175 = pneg %p174
  %177 = shalt.err (%p175)

</llo_original>
